<compile_context>
chip_gen: v7x
topology: tpu7x:2x2x1
jax: 0.10.0
libtpu: 0.0.40
codegen_flags: <defaults>
</compile_context>

<pallas_src>
import functools

import jax
import jax.numpy as jnp
from jax.experimental import pallas as pl
from jax.experimental.pallas import tpu as pltpu


_BATCH_TILE_CAP = 2048  # rows; a 2048 x D_in f32 x-tile is small vs. VMEM even double-buffered.


def _round_up(x, m):
    return ((x + m - 1) // m) * m


def _mlp_kernel(x_ref, w1_ref, b1_ref, w2_ref, b2_ref, o_ref):
    # Layer 1: (block_b, D_in) @ (D_in, H1) on the MXU, f32 accumulation
    # (inputs may be f32 or bf16; biases/weights of layer 2 stay f32).
    h = jnp.dot(x_ref[...], w1_ref[...], preferred_element_type=jnp.float32)
    h = jnp.maximum(h + b1_ref[...], 0.0)                       # bias + ReLU (VPU)
    # Layer 2 (D_out == 1): VPU multiply against the (1, H1) weight row, then
    # an XLU lane reduction -- avoids a <1%-utilized width-1 MXU matmul.
    y = jnp.sum(h * w2_ref[...], axis=-1, keepdims=True) + b2_ref[...]
    # Sigmoid via tanh so the transcendental runs on the EUP slot; narrow
    # (block_b, 1) result stored directly into the (B, 1) output.
    o_ref[...] = (0.5 * (jnp.tanh(0.5 * y) + 1.0)).astype(o_ref.dtype)


@functools.partial(jax.jit, static_argnames=("block_b", "use_bf16"))
def intervened_prediction_model(x, w1, b1, w2, b2, *, block_b=None, use_bf16=False):
    """sigmoid(relu(x @ w1 + b1) @ w2.T + b2) with D_out == 1.

    x : (B, D_in) f32
    w1: (D_in, H1)  (transposed vs. PyTorch linear1.weight)
    b1: (1, H1)
    w2: (1, H1)     (== PyTorch linear2.weight, since D_out == 1)
    b2: (1, 1)
    returns (B, 1) f32
    """
    B, D_in = x.shape
    H1 = w1.shape[1]
    assert w2.shape == (1, H1), "kernel is specialized to D_out == 1"

    if use_bf16:
        # Halves the dominant HBM read (x) and uses the fast bf16 MXU path on
        # v6e/v7x.  Post-matmul math stays f32.  Keep f32 end-to-end on v5e.
        x = x.astype(jnp.bfloat16)
        w1 = w1.astype(jnp.bfloat16)

    if block_b is None:
        # Large tiles amortize the ~0.35 us per-grid-step overhead and give
        # efficient HBM DMAs; targeting ~ceil(B/2) rows per tile also gives
        # >= 2 grid steps so the "parallel" batch axis can shard across the
        # two v7x TensorCores for mid-size batches.
        block_b = min(_BATCH_TILE_CAP, _round_up(pl.cdiv(B, 2), 8))

    grid = (pl.cdiv(B, block_b),)

    in_bytes = sum(int(a.size) * a.dtype.itemsize for a in (x, w1, b1, w2, b2))
    cost = pl.CostEstimate(
        flops=2 * B * (D_in * H1 + H1),
        transcendentals=B,
        bytes_accessed=in_bytes + B * 4,  # narrow (B, 1) f32 output
    )

    return pl.pallas_call(
        _mlp_kernel,
        out_shape=jax.ShapeDtypeStruct((B, 1), jnp.float32),
        grid_spec=pltpu.PrefetchScalarGridSpec(
            num_scalar_prefetch=0,
            grid=grid,
            in_specs=[
                pl.BlockSpec((block_b, D_in), lambda i: (i, 0)),  # x tile over batch
                pl.BlockSpec((D_in, H1), lambda i: (0, 0)),       # w1 (VMEM-resident)
                pl.BlockSpec((1, H1), lambda i: (0, 0)),          # b1
                pl.BlockSpec((1, H1), lambda i: (0, 0)),          # w2 row
                pl.BlockSpec((1, 1), lambda i: (0, 0)),           # b2
            ],
            out_specs=pl.BlockSpec((block_b, 1), lambda i: (i, 0)),
        ),
        compiler_params=pltpu.CompilerParams(
            dimension_semantics=("parallel",),
        ),
        cost_estimate=cost,
    )(x, w1, b1, w2, b2)


def init_params(key, d_in, h1, d_out=1):
    """Deterministic init mirroring nn.Linear's U(-1/sqrt(fan_in), 1/sqrt(fan_in))."""
    assert d_out == 1, "kernel is specialized to D_out == 1"
    k1, k2, k3, k4 = jax.random.split(key, 4)
    lim1 = 1.0 / jnp.sqrt(jnp.float32(d_in))
    lim2 = 1.0 / jnp.sqrt(jnp.float32(h1))
    w1 = jax.random.uniform(k1, (d_in, h1), jnp.float32, -lim1, lim1)   # linear1.weight.T
    b1 = jax.random.uniform(k2, (1, h1), jnp.float32, -lim1, lim1)
    w2 = jax.random.uniform(k3, (1, h1), jnp.float32, -lim2, lim2)      # linear2.weight
    b2 = jax.random.uniform(k4, (1, 1), jnp.float32, -lim2, lim2)
    return w1, b1, w2, b2


def _ref(x, w1, b1, w2, b2):
    return jax.nn.sigmoid(jnp.maximum(x @ w1 + b1, 0.0) @ w2.T + b2)


if __name__ == "__main__":
    # Small shapes consistent with the module: batch=8, D_in=32, H1=64, D_out=1.
    B, D_IN, H1, D_OUT = 8, 32, 64, 1

    key = jax.random.PRNGKey(0)
    kx, kp, kx2, kx3 = jax.random.split(key, 4)
    x = jax.random.normal(kx, (B, D_IN), jnp.float32)
    w1, b1, w2, b2 = init_params(kp, D_IN, H1, D_OUT)

    # 1) Default f32 path, single grid step.
    out = jax.block_until_ready(intervened_prediction_model(x, w1, b1, w2, b2))
    ref = _ref(x, w1, b1, w2, b2)
    assert out.shape == (B, D_OUT), out.shape
    assert jnp.allclose(out, ref, atol=1e-5, rtol=1e-5), "mismatch vs reference (f32)"

    # 2) Multi-step grid with a partial last tile (B not a multiple of block_b).
    B2 = 200
    x2 = jax.random.normal(kx2, (B2, D_IN), jnp.float32)
    out2 = jax.block_until_ready(intervened_prediction_model(x2, w1, b1, w2, b2))
    ref2 = _ref(x2, w1, b1, w2, b2)
    assert out2.shape == (B2, D_OUT), out2.shape
    assert jnp.allclose(out2, ref2, atol=1e-5, rtol=1e-5), "mismatch vs reference (grid)"

    # 3) Optional bf16-input path (v6e/v7x); looser tolerance vs the f32 reference.
    B3 = 64
    x3 = jax.random.normal(kx3, (B3, D_IN), jnp.float32)
    out3 = jax.block_until_ready(
        intervened_prediction_model(x3, w1, b1, w2, b2, use_bf16=True))
    ref3 = _ref(x3, w1, b1, w2, b2)
    assert out3.shape == (B3, D_OUT), out3.shape
    assert jnp.allclose(out3, ref3, atol=3e-2), "mismatch vs reference (bf16)"

    print("KERNEL_OK")
</pallas_src>

<mosaic_0001>
module attributes {stable_mosaic.version = 11 : i64} {
  func.func @_mlp_kernel(%arg0: i32, %arg1: memref<8x32xf32, #tpu.memory_space<vmem>>, %arg2: memref<32x64xf32, #tpu.memory_space<vmem>>, %arg3: memref<1x64xf32, #tpu.memory_space<vmem>>, %arg4: memref<1x64xf32, #tpu.memory_space<vmem>>, %arg5: memref<1x1xf32, #tpu.memory_space<vmem>>, %arg6: memref<8x1xf32, #tpu.memory_space<vmem>>) attributes {dimension_semantics = [#tpu.dimension_semantics<parallel>], iteration_bounds = array<i64: 1>, scalar_prefetch = 0 : i64, scratch_operands = 0 : i64, tpu.core_type = #tpu.core_type<tc>, window_params = [{transform_indices = @transform_0, window_bounds = array<i64: 8, 32>}, {pipeline_mode = #tpu.pipeline_mode<synchronous>, transform_indices = @transform_1, window_bounds = array<i64: 32, 64>}, {pipeline_mode = #tpu.pipeline_mode<synchronous>, transform_indices = @transform_2, window_bounds = array<i64: 1, 64>}, {pipeline_mode = #tpu.pipeline_mode<synchronous>, transform_indices = @transform_3, window_bounds = array<i64: 1, 64>}, {pipeline_mode = #tpu.pipeline_mode<synchronous>, transform_indices = @transform_4, window_bounds = array<i64: 1, 1>}, {transform_indices = @transform_5, window_bounds = array<i64: 8, 1>}]} {
    %c0 = arith.constant 0 : index
    %c0_0 = arith.constant 0 : index
    %0 = vector.load %arg1[%c0, %c0_0] : memref<8x32xf32, #tpu.memory_space<vmem>>, vector<8x32xf32>
    %c0_1 = arith.constant 0 : index
    %c0_2 = arith.constant 0 : index
    %1 = vector.load %arg2[%c0_1, %c0_2] : memref<32x64xf32, #tpu.memory_space<vmem>>, vector<32x64xf32>
    %cst = arith.constant dense<0.000000e+00> : vector<8x64xf32>
    %2 = tpu.matmul %0, %1, %cst {dimension_numbers = #tpu.dot_dimension_numbers<[1], [0], [0], [1], [0, 0, 1, 1], [], []>} : vector<8x32xf32>, vector<32x64xf32>, vector<8x64xf32> -> vector<8x64xf32>
    %c0_3 = arith.constant 0 : index
    %c0_4 = arith.constant 0 : index
    %3 = vector.load %arg3[%c0_3, %c0_4] : memref<1x64xf32, #tpu.memory_space<vmem>>, vector<1x64xf32>
    %4 = vector.broadcast %3 : vector<1x64xf32> to vector<8x64xf32>
    %5 = arith.addf %2, %4 : vector<8x64xf32>
    %cst_5 = arith.constant 0.000000e+00 : f32
    %6 = vector.broadcast %cst_5 : f32 to vector<8x64xf32>
    %7 = arith.maximumf %5, %6 : vector<8x64xf32>
    %c0_6 = arith.constant 0 : index
    %c0_7 = arith.constant 0 : index
    %8 = vector.load %arg4[%c0_6, %c0_7] : memref<1x64xf32, #tpu.memory_space<vmem>>, vector<1x64xf32>
    %9 = vector.broadcast %8 : vector<1x64xf32> to vector<8x64xf32>
    %10 = arith.mulf %7, %9 : vector<8x64xf32>
    %cst_8 = arith.constant dense<0.000000e+00> : vector<8xf32>
    %11 = vector.multi_reduction <add>, %10, %cst_8 [1] : vector<8x64xf32> to vector<8xf32>
    %12 = vector.shape_cast %11 : vector<8xf32> to vector<8x1xf32>
    %c0_9 = arith.constant 0 : index
    %c0_10 = arith.constant 0 : index
    %13 = vector.load %arg5[%c0_9, %c0_10] : memref<1x1xf32, #tpu.memory_space<vmem>>, vector<1x1xf32>
    %14 = vector.broadcast %13 : vector<1x1xf32> to vector<8x1xf32>
    %15 = arith.addf %12, %14 : vector<8x1xf32>
    %cst_11 = arith.constant 5.000000e-01 : f32
    %16 = vector.broadcast %cst_11 : f32 to vector<8x1xf32>
    %17 = arith.mulf %16, %15 : vector<8x1xf32>
    %18 = math.tanh %17 : vector<8x1xf32>
    %cst_12 = arith.constant 1.000000e+00 : f32
    %19 = vector.broadcast %cst_12 : f32 to vector<8x1xf32>
    %20 = arith.addf %18, %19 : vector<8x1xf32>
    %cst_13 = arith.constant 5.000000e-01 : f32
    %21 = vector.broadcast %cst_13 : f32 to vector<8x1xf32>
    %22 = arith.mulf %21, %20 : vector<8x1xf32>
    %c0_14 = arith.constant 0 : index
    %c0_15 = arith.constant 0 : index
    %23 = vector.load %arg6[%c0_14, %c0_15] : memref<8x1xf32, #tpu.memory_space<vmem>>, vector<8x1xf32>
    tpu.vector_store %arg6[%c0_14, %c0_15], %22 {strides = array<i32>} : memref<8x1xf32, #tpu.memory_space<vmem>>, vector<8x1xf32>,
    return
  }
  func.func @transform_0(%arg0: i32) -> (i32, i32) {
    %c0_i32 = arith.constant 0 : i32
    %c0_i32_0 = arith.constant 0 : i32
    return %arg0, %c0_i32 : i32, i32
  }
  func.func @transform_1(%arg0: i32) -> (i32, i32) {
    %c0_i32 = arith.constant 0 : i32
    %c0_i32_0 = arith.constant 0 : i32
    %c0_i32_1 = arith.constant 0 : i32
    return %c0_i32, %c0_i32_0 : i32, i32
  }
  func.func @transform_2(%arg0: i32) -> (i32, i32) {
    %c0_i32 = arith.constant 0 : i32
    %c0_i32_0 = arith.constant 0 : i32
    %c0_i32_1 = arith.constant 0 : i32
    return %c0_i32, %c0_i32_0 : i32, i32
  }
  func.func @transform_3(%arg0: i32) -> (i32, i32) {
    %c0_i32 = arith.constant 0 : i32
    %c0_i32_0 = arith.constant 0 : i32
    %c0_i32_1 = arith.constant 0 : i32
    return %c0_i32, %c0_i32_0 : i32, i32
  }
  func.func @transform_4(%arg0: i32) -> (i32, i32) {
    %c0_i32 = arith.constant 0 : i32
    %c0_i32_0 = arith.constant 0 : i32
    %c0_i32_1 = arith.constant 0 : i32
    return %c0_i32, %c0_i32_0 : i32, i32
  }
  func.func @transform_5(%arg0: i32) -> (i32, i32) {
    %c0_i32 = arith.constant 0 : i32
    %c0_i32_0 = arith.constant 0 : i32
    return %arg0, %c0_i32 : i32, i32
  }
}

</mosaic_0001>

<llo_original>
// kernel: intervened_prediction_model.1
$region0: #{intervened_prediction_model.1}
  #allocation0 [shape = 'u32[]', space=smem, size = 0x4, offset = 0x4, fixed_abs, tag = 'smem constant byte address 0x4 - core index']
  #allocation1 [shape = 'u32[144,128]{1,0:T(1,128)}', space=vmem, size = 0x12000, scoped, tag = 'internal scratch']
  #allocation2 [shape = 'f32[1,1]{1,0:T(1,128)S(1)}', space=vmem, size = 0x200, scoped, tag = 'scoped memory for intervened_prediction_model.1']
  %s0 = inlined_call_operand.hbm [shape: f32[8,32], index: 0, kind: input, shape index: {}]
  %s1 = inlined_call_operand.hbm [shape: f32[32,64], index: 1, kind: input, shape index: {}]
  %s2 = inlined_call_operand.vmem [shape: f32[1,64], index: 2, kind: input, shape index: {}]
  %s3 = inlined_call_operand.vmem [shape: f32[1,64], index: 3, kind: input, shape index: {}]
  %s4 = inlined_call_operand.<no memory space> [shape: f32[1,1], index: 4, kind: input, shape index: {}]
  %s5 = inlined_call_operand.vmem [shape: f32[8,1], index: 5, kind: output, shape index: {}]
  %s6 = sld [smem:[#allocation0]]
  $region38: #{intervened_prediction_model.1} parent=0
    _
  %s8 = ssub.s32 1, %s6
  %s9 = scalar_select 0, %s8, %s6
  %v10 = vstv %s4
  %11 = vst [vmem:[#allocation2] sm:$0x1] %v10
  $region1: #{intervened_prediction_model.1} parent=0
    #allocation3 [shape = 'u8[4096]{0}', space=vmem, size = 0x1000, scoped, tag = 'input window, operand 0, single buffered']
    #allocation4 [shape = 's32[1]{0}', space=sflag, size = 0x4, scoped, tag = 'scoped memory for intervened_prediction_model.1']
    #allocation5 [shape = 'u8[16384]{0}', space=vmem, size = 0x4000, scoped, tag = 'input window, operand 1, single buffered']
    #allocation6 [shape = 's32[1]{0}', space=sflag, size = 0x4, scoped, tag = 'scoped memory for intervened_prediction_model.1']
    %12 = vsyncpa [#allocation4], 0
    %13 = vsyncpa [#allocation6], 0
    // Predicated region
    $region2: #{intervened_prediction_model.1} parent=1 // pred_check
      _
    $region3: #{intervened_prediction_model.1} parent=1 // pred_check_branch
      %15 = sbr.rel (0) target = $region5
    $region4: #{intervened_prediction_model.1} parent=1 // pred_region
      %s17 = ssub.s32 128, 128
      %18 = vsyncadd [#allocation4], %s17
      %s20 = sshll.u32 [#allocation3], 4
      %s21 = int_to_ptr.vmem [resolvable:$true] %s20
      %23 = dma.hbm_to_vmem [thread:$0]  %s0, 128, %s21, [#allocation4]
    $region5: #{intervened_prediction_model.1} parent=1 // pred_fallthru
      _
    // Predicated region
    $region6: #{intervened_prediction_model.1} parent=1 // pred_check
      _
    $region7: #{intervened_prediction_model.1} parent=1 // pred_check_branch
      %25 = sbr.rel (0) target = $region9
    $region8: #{intervened_prediction_model.1} parent=1 // pred_region
      %s27 = ssub.s32 512, 512
      %28 = vsyncadd [#allocation6], %s27
      %s29 = sshll.u32 [#allocation5], 4
      %s30 = int_to_ptr.vmem [resolvable:$true] %s29
      %35 = dma.hbm_to_vmem [thread:$0]  %s1, 512, %s30, [#allocation6], 128, 128, 8
    $region9: #{intervened_prediction_model.1} parent=1 // pred_fallthru
      _
    // Predicated region
    $region10: #{intervened_prediction_model.1} parent=1 // pred_check
      _
    $region11: #{intervened_prediction_model.1} parent=1 // pred_check_branch
      %37 = sbr.rel (0) target = $region13
    $region12: #{intervened_prediction_model.1} parent=1 // pred_region
      _
    $region13: #{intervened_prediction_model.1} parent=1 // pred_fallthru
      _
    // Predicated region
    $region14: #{intervened_prediction_model.1} parent=1 // pred_check
      _
    $region15: #{intervened_prediction_model.1} parent=1 // pred_check_branch
      %39 = sbr.rel (0) target = $region17
    $region16: #{intervened_prediction_model.1} parent=1 // pred_region
      _
    $region17: #{intervened_prediction_model.1} parent=1 // pred_fallthru
      _
    // Predicated region
    $region18: #{intervened_prediction_model.1} parent=1 // pred_check
      _
    $region19: #{intervened_prediction_model.1} parent=1 // pred_check_branch
      %41 = sbr.rel (0) target = $region21
    $region20: #{intervened_prediction_model.1} parent=1 // pred_region
      _
    $region21: #{intervened_prediction_model.1} parent=1 // pred_fallthru
      _
    // Predicated region
    $region22: #{intervened_prediction_model.1} parent=1 // pred_check
      _
    $region23: #{intervened_prediction_model.1} parent=1 // pred_check_branch
      %43 = sbr.rel (0) target = $region25
    $region24: #{intervened_prediction_model.1} parent=1 // pred_region
      %44 = dma.done [#allocation4], 128
    $region25: #{intervened_prediction_model.1} parent=1 // pred_fallthru
      _
    // Predicated region
    $region26: #{intervened_prediction_model.1} parent=1 // pred_check
      _
    $region27: #{intervened_prediction_model.1} parent=1 // pred_check_branch
      %46 = sbr.rel (0) target = $region29
    $region28: #{intervened_prediction_model.1} parent=1 // pred_region
      %47 = dma.done [#allocation6], 512
    $region29: #{intervened_prediction_model.1} parent=1 // pred_fallthru
      _
    %v48 = vld [vmem:[#allocation3] sm:$0xff]
    %v49 = vld [vmem:[#allocation5] sm:$0xff]
    %v50 = vld [vmem:[#allocation5 + $0x8] sm:$0xff]
    %v51 = vld [vmem:[#allocation5 + $0x10] sm:$0xff]
    %v52 = vld [vmem:[#allocation5 + $0x18] sm:$0xff]
    %v53 = vld [vmem:[%s2] sm:$0x1]
    %v55 = vlaneseq
    %v56 = vshrl.u32 %v55, 7
    %v57 = vsub.s32 0, %v56
    %v58 = vrot.slane %v53, %v57
    %vm60 = vcmask 261120
    %v62 = vsel %vm60, %v48, 0
    %64 = vmatprep.subr.mxu0 0.0
    %65 = vmatpush1.msra.mxu0 %v49
    %66 = vmatprep.subr.mxu0 0.0
    %67 = vmatpush1.msra.mxu0 %v50
    %68 = vmatprep.subr.mxu0 0.0
    %69 = vmatpush1.msra.mxu0 %v51
    %70 = vmatprep.subr.mxu0 0.0
    %71 = vmatpush1.msra.mxu0 %v52
    %72 = vmatprep.subr.mxu0 0.0
    %73 = vmatpush1.msra.mxu0 0.0
    %74 = vmatprep.subr.mxu0 0.0
    %75 = vmatpush1.msra.mxu0 0.0
    %76 = vmatprep.subr.mxu0 0.0
    %77 = vmatpush1.msra.mxu0 0.0
    %78 = vmatprep.subr.mxu0 0.0
    %79 = vmatpush1.msra.mxu0 0.0
    %80 = vmatprep.subr.mxu0 0.0
    %81 = vmatpush1.msra.mxu0 0.0
    %82 = vmatprep.subr.mxu0 0.0
    %83 = vmatpush1.msra.mxu0 0.0
    %84 = vmatprep.subr.mxu0 0.0
    %85 = vmatpush1.msra.mxu0 0.0
    %86 = vmatprep.subr.mxu0 0.0
    %87 = vmatpush1.msra.mxu0 0.0
    %88 = vmatprep.subr.mxu0 0.0
    %89 = vmatpush1.msra.mxu0 0.0
    %90 = vmatprep.subr.mxu0 0.0
    %91 = vmatpush1.msra.mxu0 0.0
    %92 = vmatprep.subr.mxu0 0.0
    %93 = vmatpush1.msra.mxu0 0.0
    %94 = vmatprep.subr.mxu0 0.0
    %95 = vmatpush1.msra.mxu0 0.0
    %96 = vmatprep.subr.mxu0 0.0
    %97 = vmatpush1.msra.mxu0 0.0
    %98 = vmatprep.subr.mxu0 0.0
    %99 = vmatpush1.msra.mxu0 0.0
    %100 = vmatprep.subr.mxu0 0.0
    %101 = vmatpush1.msra.mxu0 0.0
    %102 = vmatprep.subr.mxu0 0.0
    %103 = vmatpush1.msra.mxu0 0.0
    %104 = vmatprep.subr.mxu0 0.0
    %105 = vmatpush1.msra.mxu0 0.0
    %106 = vmatprep.subr.mxu0 0.0
    %107 = vmatpush1.msra.mxu0 0.0
    %108 = vmatprep.subr.mxu0 0.0
    %109 = vmatpush1.msra.mxu0 0.0
    %110 = vmatprep.subr.mxu0 0.0
    %111 = vmatpush1.msra.mxu0 0.0
    %112 = vmatprep.subr.mxu0 0.0
    %113 = vmatpush1.msra.mxu0 0.0
    %114 = vmatprep.subr.mxu0 0.0
    %115 = vmatpush1.msra.mxu0 0.0
    %116 = vmatprep.subr.mxu0 0.0
    %117 = vmatpush1.msra.mxu0 0.0
    %118 = vmatprep.subr.mxu0 0.0
    %119 = vmatpush1.msra.mxu0 0.0
    %120 = vmatprep.subr.mxu0 0.0
    %121 = vmatpush1.msra.mxu0 0.0
    %122 = vmatprep.subr.mxu0 0.0
    %123 = vmatpush1.msra.mxu0 0.0
    %124 = vmatprep.subr.mxu0 0.0
    %125 = vmatpush1.msra.mxu0 0.0
    %126 = vmatprep.subr.mxu0 0.0
    %127 = vmatpush1.msra.mxu0 0.0
    %128 = vmatprep.mubr.f32.mxu0 0.0
    %129 = vmatmul.mubr.f32.gmra.mrb[0].mxu0 %v62
    %v130 = vpop.f32.mrb[0].mxu0
    %v131 = vadd.f32 %v58, %v130
    %v132 = vpop.f32.mrb[0].mxu0
    %133 = vdwg.mxu0
    %v134 = vmax.f32 %v131, 0.0
    %v135 = vld [vmem:[%s3] sm:$0x1]
    %v137 = vlaneseq
    %v138 = vshrl.u32 %v137, 7
    %v139 = vsub.s32 0, %v138
    %v140 = vrot.slane %v135, %v139
    %v142 = vmul.f32 %v134, %v140
    %vm143 = vcmask 523264
    %v144 = vsel %vm143, %v142, 0.0
    %145 = vadd.xlane.f32.xlu0 %v144
    %v146 = vpop.xlane.xlu0 %145
    %v147 = vld [vmem:[#allocation2] sm:$0x1]
    %v149 = vlaneseq
    %v150 = vshrl.u32 %v149, 7
    %v151 = vsub.s32 0, %v150
    %v152 = vrot.slane %v147, %v151
    %v154 = vadd.f32 %v146, %v152
    %v155 = vmul.f32 %v154, 0.5
    %v156 = vtanh.pop %v155
    %v157 = vadd.f32 %v156, 1.0
    %v158 = vmul.f32 %v157, 0.5
    %vm159 = vcmask 7168
    %160 = vst.msk [vmem:[%s5] sm:$0xff] %vm159, %v158
    // Predicated region
    $region30: #{intervened_prediction_model.1} parent=1 // pred_check
      _
    $region31: #{intervened_prediction_model.1} parent=1 // pred_check_branch
      %162 = sbr.rel (0) target = $region33
    $region32: #{intervened_prediction_model.1} parent=1 // pred_region
      _
    $region33: #{intervened_prediction_model.1} parent=1 // pred_fallthru
      _
    // Predicated region
    $region34: #{intervened_prediction_model.1} parent=1 // pred_check
      _
    $region35: #{intervened_prediction_model.1} parent=1 // pred_check_branch
      %164 = sbr.rel (0) target = $region37
    $region36: #{intervened_prediction_model.1} parent=1 // pred_region
      _
    $region37: #{intervened_prediction_model.1} parent=1 // pred_fallthru
      _
    %165 = vsyncpa [#allocation4], 1
    %166 = vsyncpa [#allocation6], 1

</llo_original>
